<compile_context>
chip_gen: v6e
topology: v6e:2x2x1
jax: 0.10.0
libtpu: 0.0.40
codegen_flags: <defaults>
</compile_context>

<pallas_src>
import warnings
import functools
import math

import jax
import jax.numpy as jnp
from jax import lax
from jax.experimental import pallas as pl
from jax.experimental.pallas import tpu as pltpu


# ----------------------------------------------------------------------------
# Pallas kernel: one matmul + bias + ReLU (+ 2x2 max pool) per invocation.
# ----------------------------------------------------------------------------
def _convpool_kernel(w_ref, p_ref, b_ref, o_ref, *, pool, m_out):
    """Single-step fused ConvPool.

    w_ref : (OCp, KKC)    transposed / flattened conv weights (zero-padded rows)
    p_ref : (KKC, M)      im2col patches; M = (4 if pool else 1) * B*OHp*OWp,
                          the four 2x2-pool positions are 4 contiguous lane blocks
    b_ref : (OCp, 1)      bias column
    o_ref : (OCp, m_out)  lane-dense output slab: channels x (B * flattened space)
    """
    # One MXU matmul: contraction over the full K*K*C dimension.
    r = jnp.dot(w_ref[...], p_ref[...], preferred_element_type=jnp.float32)
    # Bias + ReLU on the dense (OCp, M) slab.
    r = jnp.maximum(r + b_ref[...], 0.0)
    if pool:
        # 2x2 max pool == element-wise max of the 4 contiguous lane blocks.
        r = jnp.maximum(
            jnp.maximum(r[:, 0 * m_out:1 * m_out], r[:, 1 * m_out:2 * m_out]),
            jnp.maximum(r[:, 2 * m_out:3 * m_out], r[:, 3 * m_out:4 * m_out]))
    o_ref[...] = r.astype(o_ref.dtype)


@functools.partial(jax.jit, static_argnames=("downsample",))
def convpool_forward(x_nchw, w_oihw, bias, downsample):
    """Conv2d(valid, stride 1) + ReLU [+ 2x2 max pool, floor] via one Pallas step.

    x: (B, C, H, W) f32; w: (OC, C, K, K); bias: (OC,).  Returns NCHW.
    """
    B, C, H, W = x_nchw.shape
    OC, _, K, _ = w_oihw.shape
    OH, OW = H - K + 1, W - K + 1
    KKC = K * K * C
    OCp = ((OC + 7) // 8) * 8   # pad channel rows to a sublane multiple

    x = x_nchw.astype(jnp.float32)

    # --- im2col, built by XLA at the boundary (fused under jit).  Columns are
    # ordered (kh, kw, c); rows are ordered (ph, pw, b, oh2, ow2) so the four
    # pool positions form 4 contiguous lane blocks for the in-kernel pool. ---
    if downsample:
        OH2, OW2 = OH // 2, OW // 2
        OHe, OWe = 2 * OH2, 2 * OW2        # floor-mode crop, like F.max_pool2d
        OHp, OWp = OH2, OW2
        m_out = B * OH2 * OW2
        wins = [x[:, :, kh:kh + OHe, kw:kw + OWe].reshape(B, C, OH2, 2, OW2, 2)
                for kh in range(K) for kw in range(K)]
        p = jnp.stack(wins, axis=0)              # (KK, B, C, OH2, ph, OW2, pw)
        p = p.transpose(0, 2, 4, 6, 1, 3, 5)     # (KK, C, ph, pw, B, OH2, OW2)
        patches_t = p.reshape(KKC, 4 * m_out)
    else:
        OHp, OWp = OH, OW
        m_out = B * OH * OW
        wins = [x[:, :, kh:kh + OH, kw:kw + OW] for kh in range(K) for kw in range(K)]
        p = jnp.stack(wins, axis=0)              # (KK, B, C, OH, OW)
        p = p.transpose(0, 2, 1, 3, 4)           # (KK, C, B, OH, OW)
        patches_t = p.reshape(KKC, m_out)

    M_in = patches_t.shape[1]

    # Weights flattened to (OCp, K*K*C) so the matmul result is channel-major
    # (lane-dense M in the last dim).  Rows beyond OC are zero.
    w_t = w_oihw.astype(jnp.float32).transpose(0, 2, 3, 1).reshape(OC, KKC)
    w_t = jnp.pad(w_t, ((0, OCp - OC), (0, 0)))
    b_col = jnp.pad(bias.astype(jnp.float32).reshape(OC, 1), ((0, OCp - OC), (0, 0)))

    kernel = functools.partial(_convpool_kernel, pool=bool(downsample), m_out=m_out)

    out_flat = pl.pallas_call(
        kernel,
        out_shape=jax.ShapeDtypeStruct((OCp, m_out), jnp.float32),
        grid_spec=pltpu.PrefetchScalarGridSpec(
            num_scalar_prefetch=0,
            # Whole batch in ONE step: at these sizes per-step overhead dominates.
            # For large B, tile M here with a "parallel" axis (also feeds v7x's 2nd TC).
            grid=(1,),
            in_specs=[
                pl.BlockSpec((OCp, KKC), lambda i: (0, 0)),
                pl.BlockSpec((KKC, M_in), lambda i: (0, 0)),
                pl.BlockSpec((OCp, 1), lambda i: (0, 0)),
            ],
            out_specs=pl.BlockSpec((OCp, m_out), lambda i: (0, 0)),
        ),
        compiler_params=pltpu.CompilerParams(
            dimension_semantics=("arbitrary",)),
    )(w_t, patches_t, b_col)

    # (OCp, B*OHp*OWp) -> NCHW; 432-element permute, fused by XLA under jit.
    out = out_flat[:OC].reshape(OC, B, OHp, OWp).transpose(1, 0, 2, 3)
    return out


# ----------------------------------------------------------------------------
# ConvPool module (the per-node `transform` of the Tree).
# ----------------------------------------------------------------------------
class ConvPool:
    """1 convolution + ReLU + 1 max pooling (Pallas port of the PyTorch module)."""

    def __init__(self, input_nc, input_width, input_height, ngf=6,
                 kernel_size=5, downsample=True, seed=0, **kwargs):
        self.downsample = downsample
        if max(input_width, input_height) < kernel_size:
            warnings.warn('Router kernel too large, shrink it')
            kernel_size = max(input_width, input_height)
            self.downsample = False
        self.kernel_size = kernel_size
        self.ngf = ngf

        # Deterministic init mimicking nn.Conv2d default: uniform(-b, b), b=1/sqrt(fan_in).
        key = jax.random.PRNGKey(seed)
        kw_key, kb_key = jax.random.split(key)
        fan_in = input_nc * kernel_size * kernel_size
        bound = 1.0 / math.sqrt(fan_in)
        self.weight = jax.random.uniform(
            kw_key, (ngf, input_nc, kernel_size, kernel_size),
            minval=-bound, maxval=bound, dtype=jnp.float32)
        self.bias = jax.random.uniform(
            kb_key, (ngf,), minval=-bound, maxval=bound, dtype=jnp.float32)

        self.outputshape = self.get_outputshape(input_nc, input_width, input_height)

    def get_outputshape(self, input_nc, input_width, input_height):
        # Mirrors the PyTorch module, which derives this from a dummy forward on
        # a (1, input_nc, input_width, input_height) tensor.
        oh = input_width - self.kernel_size + 1
        ow = input_height - self.kernel_size + 1
        if self.downsample:
            oh, ow = oh // 2, ow // 2
        return (1, self.ngf, oh, ow)

    def forward(self, x):
        return convpool_forward(x, self.weight, self.bias, self.downsample)

    __call__ = forward


# ----------------------------------------------------------------------------
# Minimal Tree (root + two leaf children), breadth-first forward (eval mode).
# The per-node transforms are the Pallas ConvPool kernel above.
# ----------------------------------------------------------------------------
def _init_linear(key, fan_in, fan_out):
    kw, kb = jax.random.split(key)
    bound = 1.0 / math.sqrt(fan_in)
    w = jax.random.uniform(kw, (fan_in, fan_out), minval=-bound, maxval=bound,
                           dtype=jnp.float32)
    b = jax.random.uniform(kb, (fan_out,), minval=-bound, maxval=bound,
                           dtype=jnp.float32)
    return w, b


class Tree:
    """Adaptive-Neural-Tree forward for a fixed 3-node tree (root + 2 leaves).

    out = log(1e-10 + p_left * exp(s_left) + (1 - p_left) * exp(s_right))
    with p_left = router(T0(x)), s_i = classifier_i(T_i(T0(x))).
    """
    # TODO(synk): the general data-dependent tree growth/traversal over an
    # arbitrary tree_struct (split/extend bookkeeping) is host-side Python
    # control flow over sub-modules; only the per-node compute is kernelized.

    def __init__(self, input_nc, input_width, input_height, no_classes=10,
                 ngf=6, kernel_size=5, seed=2024):
        self.t0 = ConvPool(input_nc, input_width, input_height, ngf=ngf,
                           kernel_size=kernel_size, downsample=True, seed=seed)
        _, c1, h1, w1 = self.t0.outputshape
        self.t1 = ConvPool(c1, h1, w1, ngf=ngf, kernel_size=kernel_size,
                           downsample=True, seed=seed + 1)
        self.t2 = ConvPool(c1, h1, w1, ngf=ngf, kernel_size=kernel_size,
                           downsample=True, seed=seed + 2)
        feat_root = c1 * h1 * w1
        _, c2, h2, w2 = self.t1.outputshape
        feat_leaf = c2 * h2 * w2

        key = jax.random.PRNGKey(seed + 100)
        k_r, k_c1, k_c2 = jax.random.split(key, 3)
        self.router_w, self.router_b = _init_linear(k_r, feat_root, 1)
        self.cls1_w, self.cls1_b = _init_linear(k_c1, feat_leaf, no_classes)
        self.cls2_w, self.cls2_b = _init_linear(k_c2, feat_leaf, no_classes)

    def forward(self, x):
        h0 = self.t0(x)                                           # root transform (Pallas)
        f0 = h0.reshape(h0.shape[0], -1)
        p_left = jax.nn.sigmoid(f0 @ self.router_w + self.router_b)     # (B, 1)
        h1 = self.t1(h0)                                          # leaf transforms (Pallas)
        h2 = self.t2(h0)
        s1 = jax.nn.log_softmax(h1.reshape(h1.shape[0], -1) @ self.cls1_w + self.cls1_b, axis=-1)
        s2 = jax.nn.log_softmax(h2.reshape(h2.shape[0], -1) @ self.cls2_w + self.cls2_b, axis=-1)
        y_pred = p_left * jnp.exp(s1) + (1.0 - p_left) * jnp.exp(s2)
        return jnp.log(1e-10 + y_pred)

    __call__ = forward


# ----------------------------------------------------------------------------
# Pure-JAX references for correctness checking.
# ----------------------------------------------------------------------------
def _reference(x_nchw, w_oihw, bias, downsample):
    out = lax.conv_general_dilated(
        x_nchw.astype(jnp.float32), w_oihw.astype(jnp.float32),
        window_strides=(1, 1), padding='VALID',
        dimension_numbers=('NCHW', 'OIHW', 'NCHW'))
    out = jnp.maximum(out + bias[None, :, None, None], 0.0)
    if downsample:
        out = lax.reduce_window(out, -jnp.inf, lax.max,
                                (1, 1, 2, 2), (1, 1, 2, 2), 'VALID')
    return out


def _tree_reference(model, x):
    h0 = _reference(x, model.t0.weight, model.t0.bias, model.t0.downsample)
    f0 = h0.reshape(h0.shape[0], -1)
    p = jax.nn.sigmoid(f0 @ model.router_w + model.router_b)
    h1 = _reference(h0, model.t1.weight, model.t1.bias, model.t1.downsample)
    h2 = _reference(h0, model.t2.weight, model.t2.bias, model.t2.downsample)
    s1 = jax.nn.log_softmax(h1.reshape(h1.shape[0], -1) @ model.cls1_w + model.cls1_b, axis=-1)
    s2 = jax.nn.log_softmax(h2.reshape(h2.shape[0], -1) @ model.cls2_w + model.cls2_b, axis=-1)
    return jnp.log(1e-10 + p * jnp.exp(s1) + (1.0 - p) * jnp.exp(s2))


if __name__ == "__main__":
    B, C, H, W = 2, 4, 16, 16
    x = jax.random.normal(jax.random.PRNGKey(0), (B, C, H, W), dtype=jnp.float32)

    # --- ConvPool transform kernel: downsample path ---
    conv = ConvPool(input_nc=C, input_width=H, input_height=W,
                    ngf=6, kernel_size=5, downsample=True)
    out = jax.block_until_ready(conv(x))
    ref = _reference(x, conv.weight, conv.bias, conv.downsample)
    assert out.shape == ref.shape, (out.shape, ref.shape)
    assert out.shape[1:] == conv.outputshape[1:], (out.shape, conv.outputshape)
    assert jnp.allclose(out, ref, atol=1e-4, rtol=1e-4), "ConvPool (pool) mismatch"

    # --- ConvPool transform kernel: no-downsample path ---
    conv_nd = ConvPool(input_nc=C, input_width=H, input_height=W,
                       ngf=6, kernel_size=5, downsample=False, seed=7)
    out_nd = jax.block_until_ready(conv_nd(x))
    ref_nd = _reference(x, conv_nd.weight, conv_nd.bias, False)
    assert out_nd.shape == ref_nd.shape
    assert jnp.allclose(out_nd, ref_nd, atol=1e-4, rtol=1e-4), "ConvPool (no pool) mismatch"

    # --- Minimal Tree breadth-first forward (root + 2 leaves) ---
    tree = Tree(C, H, W, no_classes=10)
    y = jax.block_until_ready(tree(x))
    y_ref = _tree_reference(tree, x)
    assert y.shape == (B, 10), y.shape
    assert jnp.allclose(y, y_ref, atol=1e-4, rtol=1e-4), "Tree forward mismatch"

    print("KERNEL_OK")
</pallas_src>

<mosaic_0001>
module attributes {stable_mosaic.version = 11 : i64} {
  func.func @_convpool_kernel(%arg0: i32, %arg1: memref<8x100xf32, #tpu.memory_space<vmem>>, %arg2: memref<100x288xf32, #tpu.memory_space<vmem>>, %arg3: memref<8x1xf32, #tpu.memory_space<vmem>>, %arg4: memref<8x72xf32, #tpu.memory_space<vmem>>) attributes {dimension_semantics = [#tpu.dimension_semantics<arbitrary>], iteration_bounds = array<i64: 1>, scalar_prefetch = 0 : i64, scratch_operands = 0 : i64, tpu.core_type = #tpu.core_type<tc>, window_params = [{pipeline_mode = #tpu.pipeline_mode<synchronous>, transform_indices = @transform_0, window_bounds = array<i64: 8, 100>}, {pipeline_mode = #tpu.pipeline_mode<synchronous>, transform_indices = @transform_1, window_bounds = array<i64: 100, 288>}, {pipeline_mode = #tpu.pipeline_mode<synchronous>, transform_indices = @transform_2, window_bounds = array<i64: 8, 1>}, {pipeline_mode = #tpu.pipeline_mode<synchronous>, transform_indices = @transform_3, window_bounds = array<i64: 8, 72>}]} {
    %c0 = arith.constant 0 : index
    %c0_0 = arith.constant 0 : index
    %0 = vector.load %arg1[%c0, %c0_0] : memref<8x100xf32, #tpu.memory_space<vmem>>, vector<8x100xf32>
    %c0_1 = arith.constant 0 : index
    %c0_2 = arith.constant 0 : index
    %1 = vector.load %arg2[%c0_1, %c0_2] : memref<100x288xf32, #tpu.memory_space<vmem>>, vector<100x288xf32>
    %cst = arith.constant dense<0.000000e+00> : vector<8x288xf32>
    %2 = tpu.matmul %0, %1, %cst {dimension_numbers = #tpu.dot_dimension_numbers<[1], [0], [0], [1], [0, 0, 1, 1], [], []>} : vector<8x100xf32>, vector<100x288xf32>, vector<8x288xf32> -> vector<8x288xf32>
    %c0_3 = arith.constant 0 : index
    %c0_4 = arith.constant 0 : index
    %3 = vector.load %arg3[%c0_3, %c0_4] : memref<8x1xf32, #tpu.memory_space<vmem>>, vector<8x1xf32>
    %4 = vector.broadcast %3 : vector<8x1xf32> to vector<8x288xf32>
    %5 = arith.addf %2, %4 : vector<8x288xf32>
    %cst_5 = arith.constant 0.000000e+00 : f32
    %6 = vector.broadcast %cst_5 : f32 to vector<8x288xf32>
    %7 = arith.maximumf %5, %6 : vector<8x288xf32>
    %8 = vector.extract_strided_slice %7 {offsets = [0, 0], sizes = [8, 72], strides = [1, 1]} : vector<8x288xf32> to vector<8x72xf32>
    %9 = vector.extract_strided_slice %7 {offsets = [0, 72], sizes = [8, 72], strides = [1, 1]} : vector<8x288xf32> to vector<8x72xf32>
    %10 = arith.maximumf %8, %9 : vector<8x72xf32>
    %11 = vector.extract_strided_slice %7 {offsets = [0, 144], sizes = [8, 72], strides = [1, 1]} : vector<8x288xf32> to vector<8x72xf32>
    %12 = vector.extract_strided_slice %7 {offsets = [0, 216], sizes = [8, 72], strides = [1, 1]} : vector<8x288xf32> to vector<8x72xf32>
    %13 = arith.maximumf %11, %12 : vector<8x72xf32>
    %14 = arith.maximumf %10, %13 : vector<8x72xf32>
    %c0_6 = arith.constant 0 : index
    %c0_7 = arith.constant 0 : index
    %15 = vector.load %arg4[%c0_6, %c0_7] : memref<8x72xf32, #tpu.memory_space<vmem>>, vector<8x72xf32>
    tpu.vector_store %arg4[%c0_6, %c0_7], %14 {strides = array<i32>} : memref<8x72xf32, #tpu.memory_space<vmem>>, vector<8x72xf32>,
    return
  }
  func.func @transform_0(%arg0: i32) -> (i32, i32) {
    %c0_i32 = arith.constant 0 : i32
    %c0_i32_0 = arith.constant 0 : i32
    %c0_i32_1 = arith.constant 0 : i32
    return %c0_i32, %c0_i32_0 : i32, i32
  }
  func.func @transform_1(%arg0: i32) -> (i32, i32) {
    %c0_i32 = arith.constant 0 : i32
    %c0_i32_0 = arith.constant 0 : i32
    %c0_i32_1 = arith.constant 0 : i32
    return %c0_i32, %c0_i32_0 : i32, i32
  }
  func.func @transform_2(%arg0: i32) -> (i32, i32) {
    %c0_i32 = arith.constant 0 : i32
    %c0_i32_0 = arith.constant 0 : i32
    %c0_i32_1 = arith.constant 0 : i32
    return %c0_i32, %c0_i32_0 : i32, i32
  }
  func.func @transform_3(%arg0: i32) -> (i32, i32) {
    %c0_i32 = arith.constant 0 : i32
    %c0_i32_0 = arith.constant 0 : i32
    %c0_i32_1 = arith.constant 0 : i32
    return %c0_i32, %c0_i32_0 : i32, i32
  }
}

</mosaic_0001>

<llo_original>
// kernel: convpool_forward.1
$region0: #{convpool_forward.1}
  #allocation0 [shape = 'u32[]', space=smem, size = 0x4, offset = 0x4, fixed_abs, tag = 'smem constant byte address 0x4 - core index']
  #allocation1 [shape = 'u32[144,128]{1,0:T(1,128)}', space=vmem, size = 0x12000, scoped, tag = 'internal scratch']
  %s0 = inlined_call_operand.vmem [shape: f32[8,100], index: 0, kind: input, shape index: {}]
  %s1 = inlined_call_operand.vmem [shape: f32[100,288], index: 1, kind: input, shape index: {}]
  %s2 = inlined_call_operand.vmem [shape: f32[8,1], index: 2, kind: input, shape index: {}]
  %s3 = inlined_call_operand.vmem [shape: f32[8,72], index: 3, kind: output, shape index: {}]
  %s4 = sld [smem:[#allocation0]]
  $region22: #{convpool_forward.1} parent=0
    _
  %s6 = ssub.s32 1, %s4
  %s7 = scalar_select 0, %s6, %s4
  // Predicated region
  $region2: #{convpool_forward.1} parent=0 // pred_check
    _
  $region3: #{convpool_forward.1} parent=0 // pred_check_branch
    %9 = sbr.rel (0) target = $region5
  $region4: #{convpool_forward.1} parent=0 // pred_region
    _
  $region5: #{convpool_forward.1} parent=0 // pred_fallthru
    _
  // Predicated region
  $region6: #{convpool_forward.1} parent=0 // pred_check
    _
  $region7: #{convpool_forward.1} parent=0 // pred_check_branch
    %11 = sbr.rel (0) target = $region9
  $region8: #{convpool_forward.1} parent=0 // pred_region
    _
  $region9: #{convpool_forward.1} parent=0 // pred_fallthru
    _
  // Predicated region
  $region10: #{convpool_forward.1} parent=0 // pred_check
    _
  $region11: #{convpool_forward.1} parent=0 // pred_check_branch
    %13 = sbr.rel (0) target = $region13
  $region12: #{convpool_forward.1} parent=0 // pred_region
    _
  $region13: #{convpool_forward.1} parent=0 // pred_fallthru
    _
  %v14 = vld [vmem:[%s0] sm:$0xff]
  %v15 = vld [vmem:[%s1] sm:$0xff]
  %v16 = vld [vmem:[%s1 + $0x8] sm:$0xff]
  %v17 = vld [vmem:[%s1 + $0x10] sm:$0xff]
  %v18 = vld [vmem:[%s1 + $0x18] sm:$0xff]
  %v19 = vld [vmem:[%s1 + $0x20] sm:$0xff]
  %v20 = vld [vmem:[%s1 + $0x28] sm:$0xff]
  %v21 = vld [vmem:[%s1 + $0x30] sm:$0xff]
  %v22 = vld [vmem:[%s1 + $0x38] sm:$0xff]
  %v23 = vld [vmem:[%s1 + $0x40] sm:$0xff]
  %v24 = vld [vmem:[%s1 + $0x48] sm:$0xff]
  %v25 = vld [vmem:[%s1 + $0x50] sm:$0xff]
  %v26 = vld [vmem:[%s1 + $0x58] sm:$0xff]
  %v27 = vld [vmem:[%s1 + $0x60] sm:$0xff]
  %v28 = vld [vmem:[%s1 + $0x68] sm:$0xff]
  %v29 = vld [vmem:[%s1 + $0x70] sm:$0xff]
  %v30 = vld [vmem:[%s1 + $0x78] sm:$0xff]
  %v31 = vld [vmem:[%s1 + $0x80] sm:$0xff]
  %v32 = vld [vmem:[%s1 + $0x88] sm:$0xff]
  %v33 = vld [vmem:[%s1 + $0x90] sm:$0xff]
  %v34 = vld [vmem:[%s1 + $0x98] sm:$0xff]
  %v35 = vld [vmem:[%s1 + $0xa0] sm:$0xff]
  %v36 = vld [vmem:[%s1 + $0xa8] sm:$0xff]
  %v37 = vld [vmem:[%s1 + $0xb0] sm:$0xff]
  %v38 = vld [vmem:[%s1 + $0xb8] sm:$0xff]
  %v39 = vld [vmem:[%s1 + $0xc0] sm:$0xff]
  %v40 = vld [vmem:[%s1 + $0xc8] sm:$0xff]
  %v41 = vld [vmem:[%s1 + $0xd0] sm:$0xff]
  %v42 = vld [vmem:[%s1 + $0xd8] sm:$0xff]
  %v43 = vld [vmem:[%s1 + $0xe0] sm:$0xff]
  %v44 = vld [vmem:[%s1 + $0xe8] sm:$0xff]
  %v45 = vld [vmem:[%s1 + $0xf0] sm:$0xff]
  %v46 = vld [vmem:[%s1 + $0xf8] sm:$0xff]
  %v47 = vld [vmem:[%s1 + $0x100] sm:$0xff]
  %v48 = vld [vmem:[%s1 + $0x108] sm:$0xff]
  %v49 = vld [vmem:[%s1 + $0x110] sm:$0xff]
  %v50 = vld [vmem:[%s1 + $0x118] sm:$0xff]
  %v51 = vld [vmem:[%s1 + $0x120] sm:$0xf]
  %v52 = vld [vmem:[%s1 + $0x128] sm:$0xf]
  %v53 = vld [vmem:[%s1 + $0x130] sm:$0xf]
  %v54 = vld [vmem:[%s2] sm:$0xff]
  %56 = vset.pattern.permute.xlu0 0
  %57 = vperm.xlu0 %56, %v54
  %v58 = vpop.permute.xlu0 %57
  %vm60 = vcmask 818176
  %v62 = vsel %vm60, %v14, 0
  %vm64 = vcmask 1043456
  %v66 = vsel %vm64, %v51, 0
  %v69 = vsel %vm64, %v52, 0
  %v72 = vsel %vm64, %v53, 0
  %74 = vmatprep.subr.mxu0 0.0
  %75 = vmatpush1.msra.mxu0 0.0
  %76 = vmatprep.subr.mxu0 0.0
  %77 = vmatpush1.msra.mxu0 0.0
  %78 = vmatprep.subr.mxu0 0.0
  %79 = vmatpush1.msra.mxu0 0.0
  %80 = vmatprep.subr.mxu0 %v69
  %81 = vmatpush1.msra.mxu0 %v66
  %82 = vmatprep.subr.mxu0 %v49
  %83 = vmatpush1.msra.mxu0 %v48
  %84 = vmatprep.subr.mxu0 %v46
  %85 = vmatpush1.msra.mxu0 %v45
  %86 = vmatprep.subr.mxu0 %v43
  %87 = vmatpush1.msra.mxu0 %v42
  %88 = vmatprep.subr.mxu0 %v40
  %89 = vmatpush1.msra.mxu0 %v39
  %90 = vmatprep.subr.mxu0 %v37
  %91 = vmatpush1.msra.mxu0 %v36
  %92 = vmatprep.subr.mxu0 %v34
  %93 = vmatpush1.msra.mxu0 %v33
  %94 = vmatprep.subr.mxu0 %v31
  %95 = vmatpush1.msra.mxu0 %v30
  %96 = vmatprep.subr.mxu0 %v28
  %97 = vmatpush1.msra.mxu0 %v27
  %98 = vmatprep.subr.mxu0 %v25
  %99 = vmatpush1.msra.mxu0 %v24
  %100 = vmatprep.subr.mxu0 %v22
  %101 = vmatpush1.msra.mxu0 %v21
  %102 = vmatprep.subr.mxu0 %v19
  %103 = vmatpush1.msra.mxu0 %v18
  %104 = vmatprep.subr.mxu0 %v16
  %105 = vmatpush1.msra.mxu0 %v15
  %106 = vmatprep.subr.mxu0 0.0
  %107 = vmatpush2.msra.mxu0 0.0
  %108 = vmatprep.subr.mxu0 0.0
  %109 = vmatpush2.msra.mxu0 0.0
  %110 = vmatprep.subr.mxu0 0.0
  %111 = vmatpush2.msra.mxu0 0.0
  %112 = vmatprep.subr.mxu0 0.0
  %113 = vmatpush2.msra.mxu0 0.0
  %114 = vmatprep.subr.mxu0 0.0
  %115 = vmatpush2.msra.mxu0 0.0
  %116 = vmatprep.subr.mxu0 0.0
  %117 = vmatpush2.msra.mxu0 0.0
  %118 = vmatprep.subr.mxu0 0.0
  %119 = vmatpush2.msra.mxu0 0.0
  %120 = vmatprep.subr.mxu0 0.0
  %121 = vmatpush2.msra.mxu0 0.0
  %122 = vmatprep.subr.mxu0 0.0
  %123 = vmatpush2.msra.mxu0 0.0
  %124 = vmatprep.subr.mxu0 0.0
  %125 = vmatpush2.msra.mxu0 0.0
  %126 = vmatprep.subr.mxu0 0.0
  %127 = vmatpush2.msra.mxu0 0.0
  %128 = vmatprep.subr.mxu0 0.0
  %129 = vmatpush2.msra.mxu0 0.0
  %130 = vmatprep.subr.mxu0 0.0
  %131 = vmatpush2.msra.mxu0 0.0
  %132 = vmatprep.subr.mxu0 0.0
  %133 = vmatpush2.msra.mxu0 0.0
  %134 = vmatprep.subr.mxu0 0.0
  %135 = vmatpush2.msra.mxu0 0.0
  %136 = vmatprep.subr.mxu0 0.0
  %137 = vmatpush2.msra.mxu0 0.0
  %138 = vmatprep.mubr.f32.mxu0 0.0
  %139 = vmatmul.mubr.f32.gmra.mxu0 %v62
  %v140 = vpop.f32.mrf.mxu0
  %v141 = vadd.f32 %v58, %v140
  %v142 = vpop.f32.mrf.mxu0
  %v143 = vadd.f32 %v58, %v142
  %144 = vdwg.mxu0
  %145 = vmatprep.subr.mxu0 0.0
  %146 = vmatpush1.msra.mxu0 0.0
  %147 = vmatprep.subr.mxu0 0.0
  %148 = vmatpush1.msra.mxu0 0.0
  %149 = vmatprep.subr.mxu0 0.0
  %150 = vmatpush1.msra.mxu0 0.0
  %151 = vmatprep.subr.mxu0 0.0
  %152 = vmatpush1.msra.mxu0 %v72
  %153 = vmatprep.subr.mxu0 0.0
  %154 = vmatpush1.msra.mxu0 %v50
  %155 = vmatprep.subr.mxu0 0.0
  %156 = vmatpush1.msra.mxu0 %v47
  %157 = vmatprep.subr.mxu0 0.0
  %158 = vmatpush1.msra.mxu0 %v44
  %159 = vmatprep.subr.mxu0 0.0
  %160 = vmatpush1.msra.mxu0 %v41
  %161 = vmatprep.subr.mxu0 0.0
  %162 = vmatpush1.msra.mxu0 %v38
  %163 = vmatprep.subr.mxu0 0.0
  %164 = vmatpush1.msra.mxu0 %v35
  %165 = vmatprep.subr.mxu0 0.0
  %166 = vmatpush1.msra.mxu0 %v32
  %167 = vmatprep.subr.mxu0 0.0
  %168 = vmatpush1.msra.mxu0 %v29
  %169 = vmatprep.subr.mxu0 0.0
  %170 = vmatpush1.msra.mxu0 %v26
  %171 = vmatprep.subr.mxu0 0.0
  %172 = vmatpush1.msra.mxu0 %v23
  %173 = vmatprep.subr.mxu0 0.0
  %174 = vmatpush1.msra.mxu0 %v20
  %175 = vmatprep.subr.mxu0 0.0
  %176 = vmatpush1.msra.mxu0 %v17
  %177 = vmatprep.subr.mxu0 0.0
  %178 = vmatpush2.msra.mxu0 0.0
  %179 = vmatprep.subr.mxu0 0.0
  %180 = vmatpush2.msra.mxu0 0.0
  %181 = vmatprep.subr.mxu0 0.0
  %182 = vmatpush2.msra.mxu0 0.0
  %183 = vmatprep.subr.mxu0 0.0
  %184 = vmatpush2.msra.mxu0 0.0
  %185 = vmatprep.subr.mxu0 0.0
  %186 = vmatpush2.msra.mxu0 0.0
  %187 = vmatprep.subr.mxu0 0.0
  %188 = vmatpush2.msra.mxu0 0.0
  %189 = vmatprep.subr.mxu0 0.0
  %190 = vmatpush2.msra.mxu0 0.0
  %191 = vmatprep.subr.mxu0 0.0
  %192 = vmatpush2.msra.mxu0 0.0
  %193 = vmatprep.subr.mxu0 0.0
  %194 = vmatpush2.msra.mxu0 0.0
  %195 = vmatprep.subr.mxu0 0.0
  %196 = vmatpush2.msra.mxu0 0.0
  %197 = vmatprep.subr.mxu0 0.0
  %198 = vmatpush2.msra.mxu0 0.0
  %199 = vmatprep.subr.mxu0 0.0
  %200 = vmatpush2.msra.mxu0 0.0
  %201 = vmatprep.subr.mxu0 0.0
  %202 = vmatpush2.msra.mxu0 0.0
  %203 = vmatprep.subr.mxu0 0.0
  %204 = vmatpush2.msra.mxu0 0.0
  %205 = vmatprep.subr.mxu0 0.0
  %206 = vmatpush2.msra.mxu0 0.0
  %207 = vmatprep.subr.mxu0 0.0
  %208 = vmatpush2.msra.mxu0 0.0
  %209 = vmatprep.mubr.f32.mxu0 0.0
  %210 = vmatmul.mubr.f32.gmra.mxu0 %v62
  %v211 = vpop.f32.mrf.mxu0
  %v212 = vadd.f32 %v58, %v211
  %v213 = vpop.f32.mrf.mxu0
  %214 = vdwg.mxu0
  %v215 = vmax.f32 %v141, 0.0
  %v216 = vmax.f32 %v143, 0.0
  %v217 = vmax.f32 %v212, 0.0
  %220 = vrot.lane.b32.xlu0 %v215, 56
  %v221 = vpop.permute.xlu0 %220
  %222 = vrot.lane.b32.xlu0 %v216, 56
  %v223 = vpop.permute.xlu0 %222
  %vm224 = vcmask 457728
  %v225 = vsel %vm224, %v221, %v223
  %v227 = vmax.f32 %v215, %v225
  %229 = vrot.lane.b32.xlu0 %v217, 56
  %v230 = vpop.permute.xlu0 %229
  %v231 = vsel %vm224, %v223, %v230
  %v233 = vmax.f32 %v216, %v231
  %235 = vrot.lane.b32.xlu0 %v233, 112
  %v236 = vpop.permute.xlu0 %235
  %v238 = vmax.f32 %v227, %v236
  %vm239 = vcmask 588800
  %240 = vst.msk [vmem:[%s3] sm:$0xff] %vm239, %v238
  // Predicated region
  $region14: #{convpool_forward.1} parent=0 // pred_check
    _
  $region15: #{convpool_forward.1} parent=0 // pred_check_branch
    %242 = sbr.rel (0) target = $region17
  $region16: #{convpool_forward.1} parent=0 // pred_region
    _
  $region17: #{convpool_forward.1} parent=0 // pred_fallthru
    _
  // Predicated region
  $region18: #{convpool_forward.1} parent=0 // pred_check
    _
  $region19: #{convpool_forward.1} parent=0 // pred_check_branch
    %244 = sbr.rel (0) target = $region21
  $region20: #{convpool_forward.1} parent=0 // pred_region
    _
  $region21: #{convpool_forward.1} parent=0 // pred_fallthru
    _

</llo_original>
